<compile_context>
chip_gen: v7x
topology: tpu7x:2x2x1
jax: 0.10.0
libtpu: 0.0.40
codegen_flags: <defaults>
</compile_context>

<pallas_src>
import functools

import jax
import jax.numpy as jnp
from jax import lax
from jax.experimental import pallas as pl
from jax.experimental.pallas import tpu as pltpu


def _pick_tile(n, prefer, align):
    """Largest tile <= prefer that is a multiple of `align` and divides n;
    falls back to n itself (a full-extent block is always legal)."""
    t = (prefer // align) * align
    while t >= align:
        if n % t == 0:
            return t
        t -= align
    return n


# ----------------------------------------------------------------------------
# Pallas kernel: one (anchor-row tile, contrast-column tile) step.
# ----------------------------------------------------------------------------
def _supcon_kernel(a_ref, c_ref, lab_c_ref, lab_a_ref, out_ref,
                   m_acc, l_acc, ps_acc, pc_acc, *, temp_ratio):
    i = pl.program_id(0)          # anchor-row tile       ("parallel")
    j = pl.program_id(1)          # contrast-column tile  (reduction, last)

    @pl.when(j == 0)
    def _():
        m_acc[...] = jnp.full_like(m_acc, -jnp.inf)
        l_acc[...] = jnp.zeros_like(l_acc)
        ps_acc[...] = jnp.zeros_like(ps_acc)
        pc_acc[...] = jnp.zeros_like(pc_acc)

    # similarity tile; anchors already carry the 1/temperature scale.
    s = lax.dot_general(a_ref[...], c_ref[...], (((1,), (1,)), ((), ())),
                        preferred_element_type=jnp.float32)       # (rt, ct) f32
    rt, ct = s.shape

    # self-contrast (global diagonal) as a single boolean mask
    row_ids = lax.broadcasted_iota(jnp.int32, (rt, ct), 0) + i * rt
    col_ids = lax.broadcasted_iota(jnp.int32, (rt, ct), 1) + j * ct
    is_self = row_ids == col_ids

    # online log-sum-exp over columns.  The running max includes the diagonal
    # (matches torch's row max); the exp-sum excludes it (logits_mask).
    m_prev = m_acc[...]
    m_new = jnp.maximum(m_prev, jnp.max(s, axis=1, keepdims=True))
    corr = jnp.exp(m_prev - m_new)
    e = jnp.where(is_self, 0.0, jnp.exp(s - m_new))
    l_acc[...] = l_acc[...] * corr + jnp.sum(e, axis=1, keepdims=True)
    m_acc[...] = m_new

    # positives: same label, excluding self (boolean mask, no float matrices)
    pos = jnp.logical_and(lab_a_ref[...] == lab_c_ref[...],
                          jnp.logical_not(is_self))
    ps_acc[...] += jnp.sum(jnp.where(pos, s, 0.0), axis=1, keepdims=True)
    pc_acc[...] += jnp.sum(pos.astype(jnp.float32), axis=1, keepdims=True)

    @pl.when(j == pl.num_programs(1) - 1)
    def _():
        cnt = pc_acc[...]
        # sum_pos log_prob = ps - cnt*(m + log l)  =>  mean = ps/cnt - m - log l
        mean_lp = (ps_acc[...] * pl.reciprocal(cnt, approx=True)
                   - m_acc[...] - jnp.log(l_acc[...]))
        # guard anchors with zero positives (PyTorch SupConLoss would NaN here)
        mean_lp = jnp.where(cnt > 0.0, mean_lp, 0.0)
        out_ref[...] = (-temp_ratio) * mean_lp


# ----------------------------------------------------------------------------
# Wrapper: JAX glue + pallas_call
# ----------------------------------------------------------------------------
def supcon_loss(features, labels=None, *, temperature=0.1,
                base_temperature=0.07, matmul_dtype=jnp.bfloat16):
    """features: [B, V, D] float; labels: [B] int or None."""
    B, V, D = features.shape
    N = B * V

    if labels is None:
        labels = jnp.arange(B, dtype=jnp.int32)   # positives = other views only
    labels = labels.astype(jnp.int32)

    # Row ordering r = b*V + v: zero-copy reshape, no HBM transpose round-trip.
    feat = features.reshape(N, D).astype(jnp.float32)
    lab = jnp.repeat(labels, V)                   # label of row b*V+v = labels[b]

    anchors = (feat * (1.0 / float(temperature))).astype(matmul_dtype)  # fold 1/T
    contrast = feat.astype(matmul_dtype)
    lab_anchor = lab.reshape(N, 1)
    lab_contrast = lab.reshape(1, N)              # lane-dense label row

    rt = _pick_tile(N, 256, 8)                    # anchor rows per tile
    ct = _pick_tile(N, 512, 128)                  # contrast cols per tile
    grid = (N // rt, N // ct)

    # rough VMEM budget for the chosen tiles (double-buffered inputs + temps)
    in_bytes = jnp.dtype(matmul_dtype).itemsize
    dpad = -(-D // 128) * 128
    est = (2 * (rt + ct) * dpad * in_bytes            # feature tiles (x2 buffers)
           + 2 * (rt * 128 + 8 * ct) * 4              # label tiles (lane padded)
           + 6 * rt * 128 * 4                         # output + 4 scratch accums
           + 8 * rt * ct * 4)                         # in-kernel (rt, ct) temps
    vmem_limit = int(min(48 * 1024 * 1024, max(16 * 1024 * 1024, 2 * est)))

    kernel = functools.partial(
        _supcon_kernel,
        temp_ratio=float(temperature) / float(base_temperature))

    per_anchor = pl.pallas_call(
        kernel,
        out_shape=jax.ShapeDtypeStruct((N, 1), jnp.float32),
        grid_spec=pltpu.PrefetchScalarGridSpec(
            num_scalar_prefetch=0,
            grid=grid,
            in_specs=[
                pl.BlockSpec((rt, D), lambda i, j: (i, 0)),   # scaled anchors
                pl.BlockSpec((ct, D), lambda i, j: (j, 0)),   # contrast features
                pl.BlockSpec((1, ct), lambda i, j: (0, j)),   # contrast labels
                pl.BlockSpec((rt, 1), lambda i, j: (i, 0)),   # anchor labels
            ],
            out_specs=pl.BlockSpec((rt, 1), lambda i, j: (i, 0)),
            scratch_shapes=[pltpu.VMEM((rt, 1), jnp.float32)] * 4,
        ),
        compiler_params=pltpu.CompilerParams(
            dimension_semantics=("parallel", "arbitrary"),
            vmem_limit_bytes=vmem_limit,
        ),
    )(anchors, contrast, lab_contrast, lab_anchor)

    # final loss = mean over all anchors
    return jnp.mean(per_anchor)


class LossFunction:
    """JAX mirror of the PyTorch LossFunction module."""

    def __init__(self, temperature, **kwargs):
        self.temperature = float(temperature)
        self.base_temperature = 0.07
        print('Initialised SupContrast Loss')

    def __call__(self, x, label=None):
        return supcon_loss(x, label, temperature=self.temperature,
                           base_temperature=self.base_temperature)


# ----------------------------------------------------------------------------
# Pure-JAX reference (mirrors the PyTorch SupConLoss forward, torch ordering)
# ----------------------------------------------------------------------------
def _supcon_ref(features, labels, temperature, base_temperature=0.07):
    B, V, D = features.shape
    N = B * V
    contrast = jnp.transpose(features, (1, 0, 2)).reshape(N, D)
    s = contrast @ contrast.T / temperature
    logits = s - jnp.max(s, axis=1, keepdims=True)
    lab_rep = jnp.tile(labels, V)
    mask = (lab_rep[:, None] == lab_rep[None, :]).astype(jnp.float32)
    logits_mask = 1.0 - jnp.eye(N, dtype=jnp.float32)
    mask = mask * logits_mask
    exp_logits = jnp.exp(logits) * logits_mask
    log_prob = logits - jnp.log(jnp.sum(exp_logits, axis=1, keepdims=True))
    mlpp = jnp.sum(mask * log_prob, axis=1) / jnp.sum(mask, axis=1)
    return jnp.mean(-(temperature / base_temperature) * mlpp)


if __name__ == "__main__":
    key = jax.random.PRNGKey(0)
    B, V, D = 8, 2, 32          # small demo: 8 samples, 2 views, 32-dim embeds
    temperature = 0.1

    k_x, k_l = jax.random.split(key)
    x = jax.random.normal(k_x, (B, V, D), dtype=jnp.float32)
    # SupCon expects L2-normalized embeddings (done by the encoder upstream)
    x = x / jnp.linalg.norm(x, axis=-1, keepdims=True)
    labels = jax.random.randint(k_l, (B,), 0, 4, dtype=jnp.int32)

    ref = _supcon_ref(x, labels, temperature)

    # 1) full-precision MXU path: tight numerics check against the reference
    loss_f32 = jax.block_until_ready(
        supcon_loss(x, labels, temperature=temperature,
                    matmul_dtype=jnp.float32))
    assert jnp.allclose(loss_f32, ref, atol=2e-2, rtol=1e-2), (loss_f32, ref)

    # 2) default fast path (bf16 MXU operands, f32 accumulate)
    loss_fn = LossFunction(temperature)
    loss_bf16 = jax.block_until_ready(loss_fn(x, labels))
    assert jnp.allclose(loss_bf16, ref, atol=1e-1, rtol=5e-2), (loss_bf16, ref)

    # 3) label=None path (positives = other views of the same sample)
    loss_nolabel = jax.block_until_ready(loss_fn(x, None))
    ref_nolabel = _supcon_ref(x, jnp.arange(B, dtype=jnp.int32), temperature)
    assert jnp.isfinite(loss_nolabel)
    assert jnp.allclose(loss_nolabel, ref_nolabel, atol=1e-1, rtol=5e-2), (
        loss_nolabel, ref_nolabel)

    print("KERNEL_OK")
</pallas_src>

<mosaic_0001>
module attributes {stable_mosaic.version = 11 : i64} {
  func.func @_supcon_kernel(%arg0: i32, %arg1: i32, %arg2: memref<16x32xf32, #tpu.memory_space<vmem>>, %arg3: memref<16x32xf32, #tpu.memory_space<vmem>>, %arg4: memref<1x16xi32, #tpu.memory_space<vmem>>, %arg5: memref<16x1xi32, #tpu.memory_space<vmem>>, %arg6: memref<16x1xf32, #tpu.memory_space<vmem>>, %arg7: memref<16x1xf32, #tpu.memory_space<vmem>>, %arg8: memref<16x1xf32, #tpu.memory_space<vmem>>, %arg9: memref<16x1xf32, #tpu.memory_space<vmem>>, %arg10: memref<16x1xf32, #tpu.memory_space<vmem>>) attributes {dimension_semantics = [#tpu.dimension_semantics<parallel>, #tpu.dimension_semantics<arbitrary>], iteration_bounds = array<i64: 1, 1>, scalar_prefetch = 0 : i64, scratch_operands = 4 : i64, tpu.core_type = #tpu.core_type<tc>, window_params = [{transform_indices = @transform_0, window_bounds = array<i64: 16, 32>}, {transform_indices = @transform_1, window_bounds = array<i64: 16, 32>}, {transform_indices = @transform_2, window_bounds = array<i64: 1, 16>}, {transform_indices = @transform_3, window_bounds = array<i64: 16, 1>}, {transform_indices = @transform_4, window_bounds = array<i64: 16, 1>}]} {
    %c0_i32 = arith.constant 0 : i32
    %0 = arith.cmpi eq, %arg1, %c0_i32 : i32
    %1 = arith.extui %0 : i1 to i32
    %c0_i32_0 = arith.constant 0 : i32
    %2 = arith.cmpi ne, %1, %c0_i32_0 : i32
    scf.if %2 {
      %cst_34 = arith.constant 0xFF800000 : f32
      %57 = vector.broadcast %cst_34 : f32 to vector<16x1xf32>
      %c0_35 = arith.constant 0 : index
      %c0_36 = arith.constant 0 : index
      %58 = vector.load %arg7[%c0_35, %c0_36] : memref<16x1xf32, #tpu.memory_space<vmem>>, vector<16x1xf32>
      tpu.vector_store %arg7[%c0_35, %c0_36], %57 {strides = array<i32>} : memref<16x1xf32, #tpu.memory_space<vmem>>, vector<16x1xf32>,
      %cst_37 = arith.constant 0.000000e+00 : f32
      %59 = vector.broadcast %cst_37 : f32 to vector<16x1xf32>
      %c0_38 = arith.constant 0 : index
      %c0_39 = arith.constant 0 : index
      %60 = vector.load %arg8[%c0_38, %c0_39] : memref<16x1xf32, #tpu.memory_space<vmem>>, vector<16x1xf32>
      tpu.vector_store %arg8[%c0_38, %c0_39], %59 {strides = array<i32>} : memref<16x1xf32, #tpu.memory_space<vmem>>, vector<16x1xf32>,
      %cst_40 = arith.constant 0.000000e+00 : f32
      %61 = vector.broadcast %cst_40 : f32 to vector<16x1xf32>
      %c0_41 = arith.constant 0 : index
      %c0_42 = arith.constant 0 : index
      %62 = vector.load %arg9[%c0_41, %c0_42] : memref<16x1xf32, #tpu.memory_space<vmem>>, vector<16x1xf32>
      tpu.vector_store %arg9[%c0_41, %c0_42], %61 {strides = array<i32>} : memref<16x1xf32, #tpu.memory_space<vmem>>, vector<16x1xf32>,
      %cst_43 = arith.constant 0.000000e+00 : f32
      %63 = vector.broadcast %cst_43 : f32 to vector<16x1xf32>
      %c0_44 = arith.constant 0 : index
      %c0_45 = arith.constant 0 : index
      %64 = vector.load %arg10[%c0_44, %c0_45] : memref<16x1xf32, #tpu.memory_space<vmem>>, vector<16x1xf32>
      tpu.vector_store %arg10[%c0_44, %c0_45], %63 {strides = array<i32>} : memref<16x1xf32, #tpu.memory_space<vmem>>, vector<16x1xf32>,
    } else {
    }
    %c0 = arith.constant 0 : index
    %c0_1 = arith.constant 0 : index
    %3 = vector.load %arg2[%c0, %c0_1] : memref<16x32xf32, #tpu.memory_space<vmem>>, vector<16x32xf32>
    %c0_2 = arith.constant 0 : index
    %c0_3 = arith.constant 0 : index
    %4 = vector.load %arg3[%c0_2, %c0_3] : memref<16x32xf32, #tpu.memory_space<vmem>>, vector<16x32xf32>
    %cst = arith.constant dense<0.000000e+00> : vector<16x16xf32>
    %5 = tpu.matmul %3, %4, %cst {dimension_numbers = #tpu.dot_dimension_numbers<[1], [1], [0], [0], [0, 0, 1, 0], [], []>} : vector<16x32xf32>, vector<16x32xf32>, vector<16x16xf32> -> vector<16x16xf32>
    %6 = tpu.iota {dimensions = array<i32: 0>} : vector<16x16xi32>
    %c16_i32 = arith.constant 16 : i32
    %7 = arith.muli %arg0, %c16_i32 : i32
    %8 = vector.broadcast %7 : i32 to vector<16x16xi32>
    %9 = arith.addi %6, %8 : vector<16x16xi32>
    %10 = tpu.iota {dimensions = array<i32: 1>} : vector<16x16xi32>
    %c16_i32_4 = arith.constant 16 : i32
    %11 = arith.muli %arg1, %c16_i32_4 : i32
    %12 = vector.broadcast %11 : i32 to vector<16x16xi32>
    %13 = arith.addi %10, %12 : vector<16x16xi32>
    %14 = arith.cmpi eq, %9, %13 : vector<16x16xi32>
    %c0_5 = arith.constant 0 : index
    %c0_6 = arith.constant 0 : index
    %15 = vector.load %arg7[%c0_5, %c0_6] : memref<16x1xf32, #tpu.memory_space<vmem>>, vector<16x1xf32>
    %cst_7 = arith.constant dense<0xFF800000> : vector<16xf32>
    %16 = vector.multi_reduction <maximumf>, %5, %cst_7 [1] : vector<16x16xf32> to vector<16xf32>
    %17 = vector.shape_cast %16 : vector<16xf32> to vector<16x1xf32>
    %18 = arith.maximumf %15, %17 : vector<16x1xf32>
    %19 = arith.subf %15, %18 : vector<16x1xf32>
    %20 = math.exp %19 : vector<16x1xf32>
    %21 = vector.broadcast %18 : vector<16x1xf32> to vector<16x16xf32>
    %22 = arith.subf %5, %21 : vector<16x16xf32>
    %23 = math.exp %22 : vector<16x16xf32>
    %cst_8 = arith.constant 0.000000e+00 : f32
    %24 = vector.broadcast %cst_8 : f32 to vector<16x16xf32>
    %25 = arith.select %14, %24, %23 : vector<16x16xi1>, vector<16x16xf32>
    %c0_9 = arith.constant 0 : index
    %c0_10 = arith.constant 0 : index
    %26 = vector.load %arg8[%c0_9, %c0_10] : memref<16x1xf32, #tpu.memory_space<vmem>>, vector<16x1xf32>
    %27 = arith.mulf %26, %20 : vector<16x1xf32>
    %cst_11 = arith.constant dense<0.000000e+00> : vector<16xf32>
    %28 = vector.multi_reduction <add>, %25, %cst_11 [1] : vector<16x16xf32> to vector<16xf32>
    %29 = vector.shape_cast %28 : vector<16xf32> to vector<16x1xf32>
    %30 = arith.addf %27, %29 : vector<16x1xf32>
    %c0_12 = arith.constant 0 : index
    %c0_13 = arith.constant 0 : index
    %31 = vector.load %arg8[%c0_12, %c0_13] : memref<16x1xf32, #tpu.memory_space<vmem>>, vector<16x1xf32>
    tpu.vector_store %arg8[%c0_12, %c0_13], %30 {strides = array<i32>} : memref<16x1xf32, #tpu.memory_space<vmem>>, vector<16x1xf32>,
    %c0_14 = arith.constant 0 : index
    %c0_15 = arith.constant 0 : index
    %32 = vector.load %arg7[%c0_14, %c0_15] : memref<16x1xf32, #tpu.memory_space<vmem>>, vector<16x1xf32>
    tpu.vector_store %arg7[%c0_14, %c0_15], %18 {strides = array<i32>} : memref<16x1xf32, #tpu.memory_space<vmem>>, vector<16x1xf32>,
    %c0_16 = arith.constant 0 : index
    %c0_17 = arith.constant 0 : index
    %33 = vector.load %arg5[%c0_16, %c0_17] : memref<16x1xi32, #tpu.memory_space<vmem>>, vector<16x1xi32>
    %c0_18 = arith.constant 0 : index
    %c0_19 = arith.constant 0 : index
    %34 = vector.load %arg4[%c0_18, %c0_19] : memref<1x16xi32, #tpu.memory_space<vmem>>, vector<1x16xi32>
    %35 = vector.broadcast %33 : vector<16x1xi32> to vector<16x16xi32>
    %36 = vector.broadcast %34 : vector<1x16xi32> to vector<16x16xi32>
    %37 = arith.cmpi eq, %35, %36 : vector<16x16xi32>
    %cst_20 = arith.constant dense<true> : vector<16x16xi1>
    %38 = arith.xori %14, %cst_20 : vector<16x16xi1>
    %39 = arith.andi %37, %38 : vector<16x16xi1>
    %c0_21 = arith.constant 0 : index
    %c0_22 = arith.constant 0 : index
    %40 = vector.load %arg9[%c0_21, %c0_22] : memref<16x1xf32, #tpu.memory_space<vmem>>, vector<16x1xf32>
    %cst_23 = arith.constant 0.000000e+00 : f32
    %41 = vector.broadcast %cst_23 : f32 to vector<16x16xf32>
    %42 = arith.select %39, %5, %41 : vector<16x16xi1>, vector<16x16xf32>
    %cst_24 = arith.constant dense<0.000000e+00> : vector<16xf32>
    %43 = vector.multi_reduction <add>, %42, %cst_24 [1] : vector<16x16xf32> to vector<16xf32>
    %44 = vector.shape_cast %43 : vector<16xf32> to vector<16x1xf32>
    %45 = arith.addf %40, %44 : vector<16x1xf32>
    %c0_25 = arith.constant 0 : index
    %c0_26 = arith.constant 0 : index
    %46 = vector.load %arg9[%c0_25, %c0_26] : memref<16x1xf32, #tpu.memory_space<vmem>>, vector<16x1xf32>
    tpu.vector_store %arg9[%c0_25, %c0_26], %45 {strides = array<i32>} : memref<16x1xf32, #tpu.memory_space<vmem>>, vector<16x1xf32>,
    %c0_27 = arith.constant 0 : index
    %c0_28 = arith.constant 0 : index
    %47 = vector.load %arg10[%c0_27, %c0_28] : memref<16x1xf32, #tpu.memory_space<vmem>>, vector<16x1xf32>
    %48 = arith.extui %39 : vector<16x16xi1> to vector<16x16xi32>
    %49 = arith.sitofp %48 : vector<16x16xi32> to vector<16x16xf32>
    %cst_29 = arith.constant dense<0.000000e+00> : vector<16xf32>
    %50 = vector.multi_reduction <add>, %49, %cst_29 [1] : vector<16x16xf32> to vector<16xf32>
    %51 = vector.shape_cast %50 : vector<16xf32> to vector<16x1xf32>
    %52 = arith.addf %47, %51 : vector<16x1xf32>
    %c0_30 = arith.constant 0 : index
    %c0_31 = arith.constant 0 : index
    %53 = vector.load %arg10[%c0_30, %c0_31] : memref<16x1xf32, #tpu.memory_space<vmem>>, vector<16x1xf32>
    tpu.vector_store %arg10[%c0_30, %c0_31], %52 {strides = array<i32>} : memref<16x1xf32, #tpu.memory_space<vmem>>, vector<16x1xf32>,
    %c0_i32_32 = arith.constant 0 : i32
    %54 = arith.cmpi eq, %arg1, %c0_i32_32 : i32
    %55 = arith.extui %54 : i1 to i32
    %c0_i32_33 = arith.constant 0 : i32
    %56 = arith.cmpi ne, %55, %c0_i32_33 : i32
    scf.if %56 {
      %c0_34 = arith.constant 0 : index
      %c0_35 = arith.constant 0 : index
      %57 = vector.load %arg10[%c0_34, %c0_35] : memref<16x1xf32, #tpu.memory_space<vmem>>, vector<16x1xf32>
      %c0_36 = arith.constant 0 : index
      %c0_37 = arith.constant 0 : index
      %58 = vector.load %arg9[%c0_36, %c0_37] : memref<16x1xf32, #tpu.memory_space<vmem>>, vector<16x1xf32>
      %59 = tpu.reciprocal %57 {approx = true} : vector<16x1xf32> -> vector<16x1xf32>
      %60 = arith.mulf %58, %59 : vector<16x1xf32>
      %c0_38 = arith.constant 0 : index
      %c0_39 = arith.constant 0 : index
      %61 = vector.load %arg7[%c0_38, %c0_39] : memref<16x1xf32, #tpu.memory_space<vmem>>, vector<16x1xf32>
      %62 = arith.subf %60, %61 : vector<16x1xf32>
      %c0_40 = arith.constant 0 : index
      %c0_41 = arith.constant 0 : index
      %63 = vector.load %arg8[%c0_40, %c0_41] : memref<16x1xf32, #tpu.memory_space<vmem>>, vector<16x1xf32>
      %64 = math.log %63 : vector<16x1xf32>
      %65 = arith.subf %62, %64 : vector<16x1xf32>
      %cst_42 = arith.constant 0.000000e+00 : f32
      %66 = vector.broadcast %cst_42 : f32 to vector<16x1xf32>
      %67 = arith.cmpf ogt, %57, %66 : vector<16x1xf32>
      %cst_43 = arith.constant 0.000000e+00 : f32
      %68 = vector.broadcast %cst_43 : f32 to vector<16x1xf32>
      %69 = arith.select %67, %65, %68 : vector<16x1xi1>, vector<16x1xf32>
      %cst_44 = arith.constant -1.42857146 : f32
      %70 = vector.broadcast %cst_44 : f32 to vector<16x1xf32>
      %71 = arith.mulf %70, %69 : vector<16x1xf32>
      %c0_45 = arith.constant 0 : index
      %c0_46 = arith.constant 0 : index
      %72 = vector.load %arg6[%c0_45, %c0_46] : memref<16x1xf32, #tpu.memory_space<vmem>>, vector<16x1xf32>
      tpu.vector_store %arg6[%c0_45, %c0_46], %71 {strides = array<i32>} : memref<16x1xf32, #tpu.memory_space<vmem>>, vector<16x1xf32>,
    } else {
    }
    return
  }
  func.func @transform_0(%arg0: i32, %arg1: i32) -> (i32, i32) {
    %c0_i32 = arith.constant 0 : i32
    %c0_i32_0 = arith.constant 0 : i32
    return %arg0, %c0_i32 : i32, i32
  }
  func.func @transform_1(%arg0: i32, %arg1: i32) -> (i32, i32) {
    %c0_i32 = arith.constant 0 : i32
    %c0_i32_0 = arith.constant 0 : i32
    return %arg1, %c0_i32 : i32, i32
  }
  func.func @transform_2(%arg0: i32, %arg1: i32) -> (i32, i32) {
    %c0_i32 = arith.constant 0 : i32
    %c0_i32_0 = arith.constant 0 : i32
    return %c0_i32, %arg1 : i32, i32
  }
  func.func @transform_3(%arg0: i32, %arg1: i32) -> (i32, i32) {
    %c0_i32 = arith.constant 0 : i32
    %c0_i32_0 = arith.constant 0 : i32
    return %arg0, %c0_i32 : i32, i32
  }
  func.func @transform_4(%arg0: i32, %arg1: i32) -> (i32, i32) {
    %c0_i32 = arith.constant 0 : i32
    %c0_i32_0 = arith.constant 0 : i32
    return %arg0, %c0_i32 : i32, i32
  }
}

</mosaic_0001>

<llo_original>
// kernel: tpu_custom_call.1
$region0: #{tpu_custom_call.1}
  #allocation0 [shape = 'u32[]', space=smem, size = 0x4, offset = 0x4, fixed_abs, tag = 'smem constant byte address 0x4 - core index']
  #allocation1 [shape = 'u32[144,128]{1,0:T(1,128)}', space=vmem, size = 0x12000, scoped, tag = 'internal scratch']
  #allocation2 [shape = 'f32[16,1]{1,0:T(8,128)}', space=vmem, size = 0x2000, scoped, tag = 'scratch operand']
  #allocation3 [shape = 'f32[16,1]{1,0:T(8,128)}', space=vmem, size = 0x2000, scoped, tag = 'scratch operand']
  #allocation4 [shape = 'f32[16,1]{1,0:T(8,128)}', space=vmem, size = 0x2000, scoped, tag = 'scratch operand']
  #allocation5 [shape = 'f32[16,1]{1,0:T(8,128)}', space=vmem, size = 0x2000, scoped, tag = 'scratch operand']
  %s0 = inlined_call_operand.vmem [shape: f32[16,32], index: 0, kind: input, shape index: {}]
  %s1 = inlined_call_operand.hbm [shape: f32[16,32], index: 1, kind: input, shape index: {}]
  %s2 = inlined_call_operand.vmem [shape: s32[1,16], index: 2, kind: input, shape index: {}]
  %s3 = inlined_call_operand.vmem [shape: s32[16,1], index: 3, kind: input, shape index: {}]
  %s4 = inlined_call_operand.vmem [shape: f32[16,1], index: 4, kind: output, shape index: {}]
  %s5 = sld [smem:[#allocation0]]
  $region38: #{tpu_custom_call.1} parent=0
    _
  %s7 = ssub.s32 1, %s5
  %s8 = scalar_select 0, %s7, %s5
  $region1: #{tpu_custom_call.1} parent=0
    #allocation6 [shape = 'u8[8192]{0}', space=vmem, size = 0x2000, scoped, tag = 'input window, operand 1, single buffered']
    #allocation7 [shape = 's32[1]{0}', space=sflag, size = 0x4, scoped, tag = 'scoped memory for tpu_custom_call.1']
    %9 = vsyncpa [#allocation7], 0
    // Predicated region
    $region2: #{tpu_custom_call.1} parent=1 // pred_check
      _
    $region3: #{tpu_custom_call.1} parent=1 // pred_check_branch
      %11 = sbr.rel (0) target = $region5
    $region4: #{tpu_custom_call.1} parent=1 // pred_region
      _
    $region5: #{tpu_custom_call.1} parent=1 // pred_fallthru
      _
    // Predicated region
    $region6: #{tpu_custom_call.1} parent=1 // pred_check
      _
    $region7: #{tpu_custom_call.1} parent=1 // pred_check_branch
      %13 = sbr.rel (0) target = $region9
    $region8: #{tpu_custom_call.1} parent=1 // pred_region
      %s15 = ssub.s32 256, 256
      %16 = vsyncadd [#allocation7], %s15
      %s17 = sshll.u32 [#allocation6], 4
      %s18 = int_to_ptr.vmem [resolvable:$true] %s17
      %23 = dma.hbm_to_vmem [thread:$0]  %s1, 256, %s18, [#allocation7], 128, 128, 8
    $region9: #{tpu_custom_call.1} parent=1 // pred_fallthru
      _
    // Predicated region
    $region10: #{tpu_custom_call.1} parent=1 // pred_check
      _
    $region11: #{tpu_custom_call.1} parent=1 // pred_check_branch
      %25 = sbr.rel (0) target = $region13
    $region12: #{tpu_custom_call.1} parent=1 // pred_region
      _
    $region13: #{tpu_custom_call.1} parent=1 // pred_fallthru
      _
    // Predicated region
    $region14: #{tpu_custom_call.1} parent=1 // pred_check
      _
    $region15: #{tpu_custom_call.1} parent=1 // pred_check_branch
      %27 = sbr.rel (0) target = $region17
    $region16: #{tpu_custom_call.1} parent=1 // pred_region
      _
    $region17: #{tpu_custom_call.1} parent=1 // pred_fallthru
      _
    // Predicated region
    $region18: #{tpu_custom_call.1} parent=1 // pred_check
      _
    $region19: #{tpu_custom_call.1} parent=1 // pred_check_branch
      %29 = sbr.rel (0) target = $region21
    $region20: #{tpu_custom_call.1} parent=1 // pred_region
      %30 = dma.done [#allocation7], 256
    $region21: #{tpu_custom_call.1} parent=1 // pred_fallthru
      _
    %p31 = scmp.eq.s32.totalorder 0, 0
    // Predicated region
    $region22: #{tpu_custom_call.1} parent=1 // pred_check
      %p32 = pneg %p31
    $region23: #{tpu_custom_call.1} parent=1 // pred_check_branch
      %34 = sbr.rel (%p32) target = $region25
    $region24: #{tpu_custom_call.1} parent=1 // pred_region
      %vm35 = vcmask 7168
      %36 = vst.msk [vmem:[#allocation2] sm:$0xff] %vm35, -inf
      %37 = vst.msk [vmem:[#allocation2 + $0x8] sm:$0xff] %vm35, -inf
      %38 = vst.msk [vmem:[#allocation3] sm:$0xff] %vm35, 0.0
      %39 = vst.msk [vmem:[#allocation3 + $0x8] sm:$0xff] %vm35, 0.0
      %40 = vst.msk [vmem:[#allocation4] sm:$0xff] %vm35, 0.0
      %41 = vst.msk [vmem:[#allocation4 + $0x8] sm:$0xff] %vm35, 0.0
      %42 = vst.msk [vmem:[#allocation5] sm:$0xff] %vm35, 0.0
      %43 = vst.msk [vmem:[#allocation5 + $0x8] sm:$0xff] %vm35, 0.0
    $region25: #{tpu_custom_call.1} parent=1 // pred_fallthru
      _
    %v44 = vld [vmem:[%s0] sm:$0xff]
    %v45 = vld [vmem:[%s0 + $0x8] sm:$0xff]
    %v46 = vld [vmem:[#allocation6] sm:$0xff]
    %v47 = vld [vmem:[#allocation6 + $0x8] sm:$0xff]
    %vm48 = vcmask 261120
    %v50 = vsel %vm48, %v44, 0
    %v53 = vsel %vm48, %v45, 0
    %v56 = vsel %vm48, %v46, 0
    %v59 = vsel %vm48, %v47, 0
    %61 = vmatprep.subr.mxu0 0.0
    %62 = vmatpush1.xpose.msra.mxu0 %v56
    %63 = vmatprep.subr.mxu0 0.0
    %64 = vmatpush1.xpose.msra.mxu0 %v59
    %65 = vmatprep.subr.mxu0 0.0
    %66 = vmatpush1.xpose.msra.mxu0 0.0
    %67 = vmatprep.subr.mxu0 0.0
    %68 = vmatpush1.xpose.msra.mxu0 0.0
    %69 = vmatprep.subr.mxu0 0.0
    %70 = vmatpush1.xpose.msra.mxu0 0.0
    %71 = vmatprep.subr.mxu0 0.0
    %72 = vmatpush1.xpose.msra.mxu0 0.0
    %73 = vmatprep.subr.mxu0 0.0
    %74 = vmatpush1.xpose.msra.mxu0 0.0
    %75 = vmatprep.subr.mxu0 0.0
    %76 = vmatpush1.xpose.msra.mxu0 0.0
    %77 = vmatprep.subr.mxu0 0.0
    %78 = vmatpush1.xpose.msra.mxu0 0.0
    %79 = vmatprep.subr.mxu0 0.0
    %80 = vmatpush1.xpose.msra.mxu0 0.0
    %81 = vmatprep.subr.mxu0 0.0
    %82 = vmatpush1.xpose.msra.mxu0 0.0
    %83 = vmatprep.subr.mxu0 0.0
    %84 = vmatpush1.xpose.msra.mxu0 0.0
    %85 = vmatprep.subr.mxu0 0.0
    %86 = vmatpush1.xpose.msra.mxu0 0.0
    %87 = vmatprep.subr.mxu0 0.0
    %88 = vmatpush1.xpose.msra.mxu0 0.0
    %89 = vmatprep.subr.mxu0 0.0
    %90 = vmatpush1.xpose.msra.mxu0 0.0
    %91 = vmatprep.subr.mxu0 0.0
    %92 = vmatpush1.xpose.msra.mxu0 0.0
    %93 = vmatprep.subr.mxu0 0.0
    %94 = vmatpush1.xpose.msra.mxu0 0.0
    %95 = vmatprep.subr.mxu0 0.0
    %96 = vmatpush1.xpose.msra.mxu0 0.0
    %97 = vmatprep.subr.mxu0 0.0
    %98 = vmatpush1.xpose.msra.mxu0 0.0
    %99 = vmatprep.subr.mxu0 0.0
    %100 = vmatpush1.xpose.msra.mxu0 0.0
    %101 = vmatprep.subr.mxu0 0.0
    %102 = vmatpush1.xpose.msra.mxu0 0.0
    %103 = vmatprep.subr.mxu0 0.0
    %104 = vmatpush1.xpose.msra.mxu0 0.0
    %105 = vmatprep.subr.mxu0 0.0
    %106 = vmatpush1.xpose.msra.mxu0 0.0
    %107 = vmatprep.subr.mxu0 0.0
    %108 = vmatpush1.xpose.msra.mxu0 0.0
    %109 = vmatprep.subr.mxu0 0.0
    %110 = vmatpush1.xpose.msra.mxu0 0.0
    %111 = vmatprep.subr.mxu0 0.0
    %112 = vmatpush1.xpose.msra.mxu0 0.0
    %113 = vmatprep.subr.mxu0 0.0
    %114 = vmatpush1.xpose.msra.mxu0 0.0
    %115 = vmatprep.subr.mxu0 0.0
    %116 = vmatpush1.xpose.msra.mxu0 0.0
    %117 = vmatprep.subr.mxu0 0.0
    %118 = vmatpush1.xpose.msra.mxu0 0.0
    %119 = vmatprep.subr.mxu0 0.0
    %120 = vmatpush1.xpose.msra.mxu0 0.0
    %121 = vmatprep.subr.mxu0 0.0
    %122 = vmatpush1.xpose.msra.mxu0 0.0
    %123 = vmatprep.subr.mxu0 0.0
    %124 = vmatpush1.xpose.msra.mxu0 0.0
    %125 = vmatprep.mubr.f32.mxu0 0.0
    %126 = vmatmul.mubr.f32.gmra.mrb[0].mxu0 %v50
    %v127 = vpop.f32.mrb[0].mxu0
    %v128 = vadd.f32 0.0, %v127
    %v129 = vpop.f32.mrb[0].mxu0
    %130 = vmatprep.mubr.f32.mxu0 0.0
    %131 = vmatmul.mubr.f32.gmra.mrb[0].mxu0 %v53
    %v132 = vpop.f32.mrb[0].mxu0
    %v133 = vadd.f32 0.0, %v132
    %v134 = vpop.f32.mrb[0].mxu0
    %135 = vdwg.mxu0
    %v136 = vlaneseq
    %v137 = vshrl.u32 %v136, 7
    %v138 = vadd.s32 %v137, 8
    %s139 = smul.u32 0, 16
    %v140 = vstv %s139
    %v141 = vadd.s32 %v137, %v140
    %v142 = vadd.s32 %v138, %v140
    %v143 = vlaneseq
    %v144 = vand.u32 %v143, 127
    %s145 = smul.u32 0, 16
    %v146 = vstv %s145
    %v147 = vadd.s32 %v144, %v146
    %vm148 = vcmp.eq.s32.totalorder %v141, %v147
    %vm149 = vcmp.eq.s32.totalorder %v142, %v147
    %v150 = vld [vmem:[#allocation2] sm:$0xff]
    %v151 = vld [vmem:[#allocation2 + $0x8] sm:$0xff]
    %vm152 = vcmask 130048
    %v153 = vsel %vm152, %v128, -inf
    %154 = vmax.xlane.f32.xlu0 %v153
    %v155 = vpop.xlane.xlu0 %154
    %v156 = vsel %vm152, %v133, -inf
    %157 = vmax.xlane.f32.xlu0 %v156
    %v158 = vpop.xlane.xlu0 %157
    %v159 = vmax.f32 %v150, %v155
    %v160 = vmax.f32 %v151, %v158
    %v161 = vsub.f32 %v150, %v159
    %v162 = vsub.f32 %v151, %v160
    %v163 = vmul.f32 %v161, 1.442695
    %v164 = vpow.pop %v163
    %v165 = vmul.f32 %v162, 1.442695
    %v166 = vpow.pop %v165
    %168 = vset.pattern.permute.xlu0 0
    %169 = vperm.xlu0 %168, %v159
    %v170 = vpop.permute.xlu0 %169
    %173 = vset.pattern.permute.xlu0 0
    %174 = vperm.xlu0 %173, %v160
    %v175 = vpop.permute.xlu0 %174
    %v177 = vsub.f32 %v128, %v170
    %v178 = vsub.f32 %v133, %v175
    %v179 = vmul.f32 %v177, 1.442695
    %v180 = vpow.pop %v179
    %v181 = vmul.f32 %v178, 1.442695
    %v182 = vpow.pop %v181
    %v183 = vsel %vm148, 0.0, %v180
    %v184 = vsel %vm149, 0.0, %v182
    %v185 = vld [vmem:[#allocation3] sm:$0xff]
    %v186 = vld [vmem:[#allocation3 + $0x8] sm:$0xff]
    %v187 = vmul.f32 %v185, %v164
    %v188 = vmul.f32 %v186, %v166
    %v189 = vsel %vm152, %v183, 0.0
    %190 = vadd.xlane.f32.xlu0 %v189
    %v191 = vpop.xlane.xlu0 %190
    %v192 = vsel %vm152, %v184, 0.0
    %193 = vadd.xlane.f32.xlu0 %v192
    %v194 = vpop.xlane.xlu0 %193
    %v195 = vadd.f32 %v187, %v191
    %v196 = vadd.f32 %v188, %v194
    %vm197 = vcmask 7168
    %198 = vst.msk [vmem:[#allocation3] sm:$0xff] %vm197, %v195
    %199 = vst.msk [vmem:[#allocation3 + $0x8] sm:$0xff] %vm197, %v196
    %200 = vst.msk [vmem:[#allocation2] sm:$0xff] %vm197, %v159
    %201 = vst.msk [vmem:[#allocation2 + $0x8] sm:$0xff] %vm197, %v160
    %v202 = vld [vmem:[%s3] sm:$0xff]
    %v203 = vld [vmem:[%s3 + $0x8] sm:$0xff]
    %v204 = vld [vmem:[%s2] sm:$0x1]
    %205 = vset.pattern.permute.xlu0 0
    %206 = vperm.xlu0 %205, %v202
    %v207 = vpop.permute.xlu0 %206
    %208 = vset.pattern.permute.xlu0 0
    %209 = vperm.xlu0 %208, %v203
    %v210 = vpop.permute.xlu0 %209
    %v211 = vlaneseq
    %v212 = vshrl.u32 %v211, 7
    %v213 = vsub.s32 0, %v212
    %v214 = vrot.slane %v204, %v213
    %vm215 = vcmp.eq.s32.totalorder %v207, %v214
    %vm216 = vcmp.eq.s32.totalorder %v210, %v214
    %vm217 = vmxor %vm148, 1
    %vm218 = vmxor %vm149, 1
    %vm219 = vmand %vm215, %vm217
    %vm220 = vmand %vm216, %vm218
    %v221 = vld [vmem:[#allocation4] sm:$0xff]
    %v222 = vld [vmem:[#allocation4 + $0x8] sm:$0xff]
    %v223 = vsel %vm219, %v128, 0.0
    %v224 = vsel %vm220, %v133, 0.0
    %v225 = vsel %vm152, %v223, 0.0
    %226 = vadd.xlane.f32.xlu0 %v225
    %v227 = vpop.xlane.xlu0 %226
    %v228 = vsel %vm152, %v224, 0.0
    %229 = vadd.xlane.f32.xlu0 %v228
    %v230 = vpop.xlane.xlu0 %229
    %v231 = vadd.f32 %v221, %v227
    %v232 = vadd.f32 %v222, %v230
    %233 = vst.msk [vmem:[#allocation4] sm:$0xff] %vm197, %v231
    %234 = vst.msk [vmem:[#allocation4 + $0x8] sm:$0xff] %vm197, %v232
    %v235 = vld [vmem:[#allocation5] sm:$0xff]
    %v236 = vld [vmem:[#allocation5 + $0x8] sm:$0xff]
    %v237 = vsel %vm219, 1, 0
    %v238 = vsel %vm220, 1, 0
    %v239 = vcvt.s32.f32 %v237
    %v240 = vcvt.s32.f32 %v238
    %v241 = vsel %vm152, %v239, 0.0
    %242 = vadd.xlane.f32.xlu0 %v241
    %v243 = vpop.xlane.xlu0 %242
    %v244 = vsel %vm152, %v240, 0.0
    %245 = vadd.xlane.f32.xlu0 %v244
    %v246 = vpop.xlane.xlu0 %245
    %v247 = vadd.f32 %v235, %v243
    %v248 = vadd.f32 %v236, %v246
    %249 = vst.msk [vmem:[#allocation5] sm:$0xff] %vm197, %v247
    %250 = vst.msk [vmem:[#allocation5 + $0x8] sm:$0xff] %vm197, %v248
    // Predicated region
    $region26: #{tpu_custom_call.1} parent=1 // pred_check
      %p251 = pneg %p31
    $region27: #{tpu_custom_call.1} parent=1 // pred_check_branch
      %253 = sbr.rel (%p251) target = $region29
    $region28: #{tpu_custom_call.1} parent=1 // pred_region
      %v254 = vld [vmem:[#allocation5] sm:$0xff]
      %v255 = vld [vmem:[#allocation5 + $0x8] sm:$0xff]
      %v256 = vld [vmem:[#allocation4] sm:$0xff]
      %v257 = vld [vmem:[#allocation4 + $0x8] sm:$0xff]
      %v258 = vrcp.pop %v254
      %v259 = vrcp.pop %v255
      %v260 = vmul.f32 %v256, %v258
      %v261 = vmul.f32 %v257, %v259
      %v262 = vld [vmem:[#allocation2] sm:$0xff]
      %v263 = vld [vmem:[#allocation2 + $0x8] sm:$0xff]
      %v264 = vsub.f32 %v260, %v262
      %v265 = vsub.f32 %v261, %v263
      %v266 = vld [vmem:[#allocation3] sm:$0xff]
      %v267 = vld [vmem:[#allocation3 + $0x8] sm:$0xff]
      %v268 = vlog2.pop %v266
      %v269 = vmul.f32 %v268, 0.6931472
      %v270 = vlog2.pop %v267
      %v271 = vmul.f32 %v270, 0.6931472
      %v272 = vsub.f32 %v264, %v269
      %v273 = vsub.f32 %v265, %v271
      %vm274 = vcmp.gt.f32.partialorder %v254, 0.0
      %vm275 = vcmp.gt.f32.partialorder %v255, 0.0
      %v276 = vsel %vm274, %v272, 0.0
      %v277 = vsel %vm275, %v273, 0.0
      %v278 = vmul.f32 %v276, -1.4285715
      %v279 = vmul.f32 %v277, -1.4285715
      %280 = vst.msk [vmem:[%s4] sm:$0xff] %vm197, %v278
      %281 = vst.msk [vmem:[%s4 + $0x8] sm:$0xff] %vm197, %v279
    $region29: #{tpu_custom_call.1} parent=1 // pred_fallthru
      _
    // Predicated region
    $region30: #{tpu_custom_call.1} parent=1 // pred_check
      _
    $region31: #{tpu_custom_call.1} parent=1 // pred_check_branch
      %283 = sbr.rel (0) target = $region33
    $region32: #{tpu_custom_call.1} parent=1 // pred_region
      _
    $region33: #{tpu_custom_call.1} parent=1 // pred_fallthru
      _
    // Predicated region
    $region34: #{tpu_custom_call.1} parent=1 // pred_check
      _
    $region35: #{tpu_custom_call.1} parent=1 // pred_check_branch
      %285 = sbr.rel (0) target = $region37
    $region36: #{tpu_custom_call.1} parent=1 // pred_region
      _
    $region37: #{tpu_custom_call.1} parent=1 // pred_fallthru
      _
    %286 = vsyncpa [#allocation7], 1

</llo_original>
